<compile_context>
chip_gen: v7x
topology: tpu7x:2x2x1
jax: 0.10.0
libtpu: 0.0.40
codegen_flags: <defaults>
</compile_context>

<pallas_src>
import functools

import jax
import jax.numpy as jnp
from jax.experimental import pallas as pl
from jax.experimental.pallas import tpu as pltpu

PAD = 128        # padded feature width (lanes)
HIDDEN = 64      # QNetwork hidden size (from the PyTorch module)
MAX_TB = 512     # batch tile cap: fits comfortably in VMEM on v5e/v6e/v7x


def qnet_kernel(x_ref, w_ref, b_ref, out_ref):
    """One batch tile: three padded matmuls (bf16 MXU, f32 acc) + f32 bias/ReLU."""
    x = x_ref[...]                                   # (TB, PAD) f32
    h = jnp.dot(x.astype(jnp.bfloat16), w_ref[0],
                preferred_element_type=jnp.float32)  # (TB, PAD) f32 accum
    h = jnp.maximum(h + b_ref[0], 0.0)
    h = jnp.dot(h.astype(jnp.bfloat16), w_ref[1],
                preferred_element_type=jnp.float32)
    h = jnp.maximum(h + b_ref[1], 0.0)
    out = jnp.dot(h.astype(jnp.bfloat16), w_ref[2],
                  preferred_element_type=jnp.float32)
    out_ref[...] = out + b_ref[2]                    # lane-dense (TB, 128) store


def pack_params(params, state_shape, action_shape, hidden=HIDDEN, pad=PAD):
    """Zero-pad + stack the three layers once (not per call). Exact w.r.t. math."""
    w1, b1, w2, b2, w3, b3 = (params["w1"], params["b1"], params["w2"],
                              params["b2"], params["w3"], params["b3"])
    W = jnp.zeros((3, pad, pad), jnp.float32)
    W = W.at[0, :state_shape, :hidden].set(w1)
    W = W.at[1, :hidden, :hidden].set(w2)
    W = W.at[2, :hidden, :action_shape].set(w3)
    B = jnp.zeros((3, 1, pad), jnp.float32)
    B = B.at[0, 0, :hidden].set(b1.reshape(-1))
    B = B.at[1, 0, :hidden].set(b2.reshape(-1))
    B = B.at[2, 0, :action_shape].set(b3.reshape(-1))
    return {
        "W": W.astype(jnp.bfloat16),   # bf16 matmul operands
        "B": B,                        # f32 biases (epilogue stays f32)
        "state_shape": state_shape,
        "action_shape": action_shape,
    }


def qnetwork_forward(x, packed):
    """x: [batch, state_shape] f32 -> [batch, action_shape] f32."""
    W, B = packed["W"], packed["B"]
    state_shape = packed["state_shape"]
    action_shape = packed["action_shape"]
    batch = x.shape[0]

    # Batch tile: multiple of 8 (f32 sublanes), capped so x/out double-buffers
    # stay small even under v7x's 64 MiB VMEM (TB=512 -> ~1 MiB of tiles).
    tb = min(MAX_TB, pl.cdiv(batch, 8) * 8)
    batch_p = pl.cdiv(batch, tb) * tb

    # Zero-pad rows to a tile multiple and features to 128 lanes (exact: the
    # corresponding weight rows are zero).
    xp = jnp.zeros((batch_p, PAD), jnp.float32).at[:batch, :state_shape].set(x)

    grid = (batch_p // tb,)
    flops = 2 * batch * (state_shape * HIDDEN + HIDDEN * HIDDEN + HIDDEN * action_shape)
    bytes_accessed = (batch_p * PAD * 4) * 2 + W.size * 2 + B.size * 4

    out_p = pl.pallas_call(
        qnet_kernel,
        out_shape=jax.ShapeDtypeStruct((batch_p, PAD), jnp.float32),
        grid=grid,
        in_specs=[
            pl.BlockSpec((tb, PAD), lambda i: (i, 0),
                         memory_space=pltpu.MemorySpace.VMEM),
            pl.BlockSpec((3, PAD, PAD), lambda i: (0, 0, 0),
                         memory_space=pltpu.MemorySpace.VMEM),
            pl.BlockSpec((3, 1, PAD), lambda i: (0, 0, 0),
                         memory_space=pltpu.MemorySpace.VMEM),
        ],
        out_specs=pl.BlockSpec((tb, PAD), lambda i: (i, 0),
                               memory_space=pltpu.MemorySpace.VMEM),
        compiler_params=pltpu.CompilerParams(
            dimension_semantics=("parallel",),
        ),
        cost_estimate=pl.CostEstimate(
            flops=flops, transcendentals=0, bytes_accessed=bytes_accessed),
    )(xp, W, B)

    # Slice the padded rows / lane-padded action columns back off.
    return out_p[:batch, :action_shape]


def init_params(key, state_shape, action_shape, hidden=HIDDEN):
    """Deterministic synthetic init (PyTorch-like uniform fan-in scaling)."""
    ks = jax.random.split(key, 6)

    def linear(kw, kb, fan_in, fan_out):
        bound = 1.0 / jnp.sqrt(fan_in)
        w = jax.random.uniform(kw, (fan_in, fan_out), jnp.float32, -bound, bound)
        b = jax.random.uniform(kb, (1, fan_out), jnp.float32, -bound, bound)
        return w, b

    w1, b1 = linear(ks[0], ks[1], state_shape, hidden)
    w2, b2 = linear(ks[2], ks[3], hidden, hidden)
    w3, b3 = linear(ks[4], ks[5], hidden, action_shape)
    return {"w1": w1, "b1": b1, "w2": w2, "b2": b2, "w3": w3, "b3": b3}


def reference_forward(x, p):
    h1 = jnp.maximum(x @ p["w1"] + p["b1"], 0.0)
    h2 = jnp.maximum(h1 @ p["w2"] + p["b2"], 0.0)
    return h2 @ p["w3"] + p["b3"]


if __name__ == "__main__":
    key = jax.random.PRNGKey(0)
    kx, kp = jax.random.split(key)

    batch, state_shape, action_shape = 8, 16, 4
    x = jax.random.normal(kx, (batch, state_shape), jnp.float32)
    params = init_params(kp, state_shape, action_shape)
    packed = pack_params(params, state_shape, action_shape)

    out = qnetwork_forward(x, packed)
    out = jax.block_until_ready(out)

    ref = reference_forward(x, params)  # pure f32 reference
    assert out.shape == (batch, action_shape), out.shape
    # bf16 matmul operands with f32 accumulation: allow bf16-level tolerance.
    assert jnp.allclose(out, ref, atol=5e-2, rtol=5e-2), "mismatch vs reference"

    print("KERNEL_OK")
</pallas_src>

<mosaic_0001>
module attributes {stable_mosaic.version = 11 : i64} {
  func.func @qnet_kernel(%arg0: i32, %arg1: memref<8x128xf32, #tpu.memory_space<vmem>>, %arg2: memref<3x128x128xbf16, #tpu.memory_space<vmem>>, %arg3: memref<3x1x128xf32, #tpu.memory_space<vmem>>, %arg4: memref<8x128xf32, #tpu.memory_space<vmem>>) attributes {dimension_semantics = [#tpu.dimension_semantics<parallel>], iteration_bounds = array<i64: 1>, scalar_prefetch = 0 : i64, scratch_operands = 0 : i64, tpu.core_type = #tpu.core_type<tc>, window_params = [{transform_indices = @transform_0, window_bounds = array<i64: 8, 128>}, {pipeline_mode = #tpu.pipeline_mode<synchronous>, transform_indices = @transform_1, window_bounds = array<i64: 3, 128, 128>}, {pipeline_mode = #tpu.pipeline_mode<synchronous>, transform_indices = @transform_2, window_bounds = array<i64: 3, 1, 128>}, {transform_indices = @transform_3, window_bounds = array<i64: 8, 128>}]} {
    %c0 = arith.constant 0 : index
    %c0_0 = arith.constant 0 : index
    %0 = vector.load %arg1[%c0, %c0_0] : memref<8x128xf32, #tpu.memory_space<vmem>>, vector<8x128xf32>
    %1 = arith.truncf %0 : vector<8x128xf32> to vector<8x128xbf16>
    %c0_1 = arith.constant 0 : index
    %c0_2 = arith.constant 0 : index
    %c0_3 = arith.constant 0 : index
    %2 = vector.load %arg2[%c0_1, %c0_2, %c0_3] : memref<3x128x128xbf16, #tpu.memory_space<vmem>>, vector<1x128x128xbf16>
    %3 = vector.shape_cast %2 : vector<1x128x128xbf16> to vector<128x128xbf16>
    %cst = arith.constant dense<0.000000e+00> : vector<8x128xf32>
    %4 = tpu.matmul %1, %3, %cst {dimension_numbers = #tpu.dot_dimension_numbers<[1], [0], [0], [1], [0, 0, 1, 1], [], []>} : vector<8x128xbf16>, vector<128x128xbf16>, vector<8x128xf32> -> vector<8x128xf32>
    %c0_4 = arith.constant 0 : index
    %c0_5 = arith.constant 0 : index
    %c0_6 = arith.constant 0 : index
    %5 = vector.load %arg3[%c0_4, %c0_5, %c0_6] : memref<3x1x128xf32, #tpu.memory_space<vmem>>, vector<1x1x128xf32>
    %6 = vector.shape_cast %5 : vector<1x1x128xf32> to vector<1x128xf32>
    %7 = vector.broadcast %6 : vector<1x128xf32> to vector<8x128xf32>
    %8 = arith.addf %4, %7 : vector<8x128xf32>
    %cst_7 = arith.constant 0.000000e+00 : f32
    %9 = vector.broadcast %cst_7 : f32 to vector<8x128xf32>
    %10 = arith.maximumf %8, %9 : vector<8x128xf32>
    %11 = arith.truncf %10 : vector<8x128xf32> to vector<8x128xbf16>
    %c1 = arith.constant 1 : index
    %c0_8 = arith.constant 0 : index
    %c0_9 = arith.constant 0 : index
    %12 = vector.load %arg2[%c1, %c0_8, %c0_9] : memref<3x128x128xbf16, #tpu.memory_space<vmem>>, vector<1x128x128xbf16>
    %13 = vector.shape_cast %12 : vector<1x128x128xbf16> to vector<128x128xbf16>
    %cst_10 = arith.constant dense<0.000000e+00> : vector<8x128xf32>
    %14 = tpu.matmul %11, %13, %cst_10 {dimension_numbers = #tpu.dot_dimension_numbers<[1], [0], [0], [1], [0, 0, 1, 1], [], []>} : vector<8x128xbf16>, vector<128x128xbf16>, vector<8x128xf32> -> vector<8x128xf32>
    %c1_11 = arith.constant 1 : index
    %c0_12 = arith.constant 0 : index
    %c0_13 = arith.constant 0 : index
    %15 = vector.load %arg3[%c1_11, %c0_12, %c0_13] : memref<3x1x128xf32, #tpu.memory_space<vmem>>, vector<1x1x128xf32>
    %16 = vector.shape_cast %15 : vector<1x1x128xf32> to vector<1x128xf32>
    %17 = vector.broadcast %16 : vector<1x128xf32> to vector<8x128xf32>
    %18 = arith.addf %14, %17 : vector<8x128xf32>
    %cst_14 = arith.constant 0.000000e+00 : f32
    %19 = vector.broadcast %cst_14 : f32 to vector<8x128xf32>
    %20 = arith.maximumf %18, %19 : vector<8x128xf32>
    %21 = arith.truncf %20 : vector<8x128xf32> to vector<8x128xbf16>
    %c2 = arith.constant 2 : index
    %c0_15 = arith.constant 0 : index
    %c0_16 = arith.constant 0 : index
    %22 = vector.load %arg2[%c2, %c0_15, %c0_16] : memref<3x128x128xbf16, #tpu.memory_space<vmem>>, vector<1x128x128xbf16>
    %23 = vector.shape_cast %22 : vector<1x128x128xbf16> to vector<128x128xbf16>
    %cst_17 = arith.constant dense<0.000000e+00> : vector<8x128xf32>
    %24 = tpu.matmul %21, %23, %cst_17 {dimension_numbers = #tpu.dot_dimension_numbers<[1], [0], [0], [1], [0, 0, 1, 1], [], []>} : vector<8x128xbf16>, vector<128x128xbf16>, vector<8x128xf32> -> vector<8x128xf32>
    %c2_18 = arith.constant 2 : index
    %c0_19 = arith.constant 0 : index
    %c0_20 = arith.constant 0 : index
    %25 = vector.load %arg3[%c2_18, %c0_19, %c0_20] : memref<3x1x128xf32, #tpu.memory_space<vmem>>, vector<1x1x128xf32>
    %26 = vector.shape_cast %25 : vector<1x1x128xf32> to vector<1x128xf32>
    %27 = vector.broadcast %26 : vector<1x128xf32> to vector<8x128xf32>
    %28 = arith.addf %24, %27 : vector<8x128xf32>
    %c0_21 = arith.constant 0 : index
    %c0_22 = arith.constant 0 : index
    %29 = vector.load %arg4[%c0_21, %c0_22] : memref<8x128xf32, #tpu.memory_space<vmem>>, vector<8x128xf32>
    tpu.vector_store %arg4[%c0_21, %c0_22], %28 {strides = array<i32>} : memref<8x128xf32, #tpu.memory_space<vmem>>, vector<8x128xf32>,
    return
  }
  func.func @transform_0(%arg0: i32) -> (i32, i32) {
    %c0_i32 = arith.constant 0 : i32
    %c0_i32_0 = arith.constant 0 : i32
    return %arg0, %c0_i32 : i32, i32
  }
  func.func @transform_1(%arg0: i32) -> (i32, i32, i32) {
    %c0_i32 = arith.constant 0 : i32
    %c0_i32_0 = arith.constant 0 : i32
    %c0_i32_1 = arith.constant 0 : i32
    %c0_i32_2 = arith.constant 0 : i32
    return %c0_i32, %c0_i32_0, %c0_i32_1 : i32, i32, i32
  }
  func.func @transform_2(%arg0: i32) -> (i32, i32, i32) {
    %c0_i32 = arith.constant 0 : i32
    %c0_i32_0 = arith.constant 0 : i32
    %c0_i32_1 = arith.constant 0 : i32
    %c0_i32_2 = arith.constant 0 : i32
    return %c0_i32, %c0_i32_0, %c0_i32_1 : i32, i32, i32
  }
  func.func @transform_3(%arg0: i32) -> (i32, i32) {
    %c0_i32 = arith.constant 0 : i32
    %c0_i32_0 = arith.constant 0 : i32
    return %arg0, %c0_i32 : i32, i32
  }
}

</mosaic_0001>

<llo_original>
// kernel: tpu_custom_call.1
$region0: #{tpu_custom_call.1}
  #allocation0 [shape = 'u32[]', space=smem, size = 0x4, offset = 0x4, fixed_abs, tag = 'smem constant byte address 0x4 - core index']
  #allocation1 [shape = 'u32[144,128]{1,0:T(1,128)}', space=vmem, size = 0x12000, scoped, tag = 'internal scratch']
  %s0 = inlined_call_operand.hbm [shape: f32[8,128], index: 0, kind: input, shape index: {}]
  %s1 = inlined_call_operand.hbm [shape: bf16[3,128,128], index: 1, kind: input, shape index: {}]
  %s2 = inlined_call_operand.vmem [shape: f32[3,1,128], index: 2, kind: input, shape index: {}]
  %s3 = inlined_call_operand.hbm [shape: f32[8,128], index: 3, kind: output, shape index: {}]
  %s4 = sld [smem:[#allocation0]]
  $region30: #{tpu_custom_call.1} parent=0
    _
  %s6 = ssub.s32 1, %s4
  %s7 = scalar_select 0, %s6, %s4
  $region1: #{tpu_custom_call.1} parent=0
    #allocation2 [shape = 'u8[4096]{0}', space=vmem, size = 0x1000, scoped, tag = 'input window, operand 0, single buffered']
    #allocation3 [shape = 's32[1]{0}', space=sflag, size = 0x4, scoped, tag = 'scoped memory for tpu_custom_call.1']
    #allocation4 [shape = 's32[1]{0}', space=sflag, size = 0x4, scoped, tag = 'scoped memory for tpu_custom_call.1']
    #allocation5 [shape = 'u8[98304]{0}', space=vmem, size = 0x18000, scoped, tag = 'input window, operand 1, single buffered']
    #allocation6 [shape = 's32[1]{0}', space=sflag, size = 0x4, scoped, tag = 'scoped memory for tpu_custom_call.1']
    #allocation7 [shape = 'u8[4096]{0}', space=vmem, size = 0x1000, scoped, tag = 'output window, operand 0, single buffered']
    %8 = vsyncpa [#allocation3], 0
    %9 = vsyncpa [#allocation6], 0
    %10 = vsyncpa [#allocation4], 0
    // Predicated region
    $region2: #{tpu_custom_call.1} parent=1 // pred_check
      _
    $region3: #{tpu_custom_call.1} parent=1 // pred_check_branch
      %12 = sbr.rel (0) target = $region5
    $region4: #{tpu_custom_call.1} parent=1 // pred_region
      %s14 = ssub.s32 128, 128
      %15 = vsyncadd [#allocation3], %s14
      %s17 = sshll.u32 [#allocation2], 4
      %s18 = int_to_ptr.vmem [resolvable:$true] %s17
      %20 = dma.hbm_to_vmem [thread:$0]  %s0, 128, %s18, [#allocation3]
    $region5: #{tpu_custom_call.1} parent=1 // pred_fallthru
      _
    // Predicated region
    $region6: #{tpu_custom_call.1} parent=1 // pred_check
      _
    $region7: #{tpu_custom_call.1} parent=1 // pred_check_branch
      %22 = sbr.rel (0) target = $region9
    $region8: #{tpu_custom_call.1} parent=1 // pred_region
      %s24 = ssub.s32 3072, 3072
      %25 = vsyncadd [#allocation6], %s24
      %s26 = sshll.u32 [#allocation5], 4
      %s27 = int_to_ptr.vmem [resolvable:$true] %s26
      %32 = dma.hbm_to_vmem [thread:$0]  %s1, 3072, %s27, [#allocation6], 64, 64, 4
    $region9: #{tpu_custom_call.1} parent=1 // pred_fallthru
      _
    // Predicated region
    $region10: #{tpu_custom_call.1} parent=1 // pred_check
      _
    $region11: #{tpu_custom_call.1} parent=1 // pred_check_branch
      %34 = sbr.rel (0) target = $region13
    $region12: #{tpu_custom_call.1} parent=1 // pred_region
      _
    $region13: #{tpu_custom_call.1} parent=1 // pred_fallthru
      _
    // Predicated region
    $region14: #{tpu_custom_call.1} parent=1 // pred_check
      _
    $region15: #{tpu_custom_call.1} parent=1 // pred_check_branch
      %36 = sbr.rel (0) target = $region17
    $region16: #{tpu_custom_call.1} parent=1 // pred_region
      %37 = dma.done [#allocation3], 128
    $region17: #{tpu_custom_call.1} parent=1 // pred_fallthru
      _
    // Predicated region
    $region18: #{tpu_custom_call.1} parent=1 // pred_check
      _
    $region19: #{tpu_custom_call.1} parent=1 // pred_check_branch
      %39 = sbr.rel (0) target = $region21
    $region20: #{tpu_custom_call.1} parent=1 // pred_region
      %40 = dma.done [#allocation6], 3072
    $region21: #{tpu_custom_call.1} parent=1 // pred_fallthru
      _
    %v42 = vld [vmem:[#allocation2] sm:$0xff]
    %v43 = vpack.c.bf16 %v42, %v42
    %v44 = vld [vmem:[#allocation5] sm:$0xf]
    %v45 = vld [vmem:[#allocation5 + $0x4] sm:$0xf]
    %v46 = vld [vmem:[#allocation5 + $0x8] sm:$0xf]
    %v47 = vld [vmem:[#allocation5 + $0xc] sm:$0xf]
    %v48 = vld [vmem:[#allocation5 + $0x10] sm:$0xf]
    %v49 = vld [vmem:[#allocation5 + $0x14] sm:$0xf]
    %v50 = vld [vmem:[#allocation5 + $0x18] sm:$0xf]
    %v51 = vld [vmem:[#allocation5 + $0x1c] sm:$0xf]
    %v52 = vld [vmem:[#allocation5 + $0x20] sm:$0xf]
    %v53 = vld [vmem:[#allocation5 + $0x24] sm:$0xf]
    %v54 = vld [vmem:[#allocation5 + $0x28] sm:$0xf]
    %v55 = vld [vmem:[#allocation5 + $0x2c] sm:$0xf]
    %v56 = vld [vmem:[#allocation5 + $0x30] sm:$0xf]
    %v57 = vld [vmem:[#allocation5 + $0x34] sm:$0xf]
    %v58 = vld [vmem:[#allocation5 + $0x38] sm:$0xf]
    %v59 = vld [vmem:[#allocation5 + $0x3c] sm:$0xf]
    %v60 = vld [vmem:[%s2] sm:$0x1]
    %v62 = vlaneseq
    %v63 = vshrl.u32 %v62, 7
    %v64 = vsub.s32 0, %v63
    %v65 = vrot.slane %v60, %v64
    %v83 = vunpack.c.l.b16 %v44
    %v84 = vunpack.c.l.b16 %v45
    %v85 = vunpack.c.l.b16 %v46
    %v86 = vunpack.c.l.b16 %v47
    %v87 = vunpack.c.l.b16 %v48
    %v88 = vunpack.c.l.b16 %v49
    %v89 = vunpack.c.l.b16 %v50
    %v90 = vunpack.c.l.b16 %v51
    %v91 = vunpack.c.l.b16 %v52
    %v92 = vunpack.c.l.b16 %v53
    %v93 = vunpack.c.l.b16 %v54
    %v94 = vunpack.c.l.b16 %v55
    %v95 = vunpack.c.l.b16 %v56
    %v96 = vunpack.c.l.b16 %v57
    %v97 = vunpack.c.l.b16 %v58
    %v98 = vunpack.c.l.b16 %v59
    %v99 = vpack.c.b16 %v84, %v83
    %v100 = vpack.c.b16 %v86, %v85
    %v101 = vpack.c.b16 %v88, %v87
    %v102 = vpack.c.b16 %v90, %v89
    %v103 = vpack.c.b16 %v92, %v91
    %v104 = vpack.c.b16 %v94, %v93
    %v105 = vpack.c.b16 %v96, %v95
    %v106 = vpack.c.b16 %v98, %v97
    %115 = vmatprep.subr.bf16.mxu0 0
    %116 = vmatpush1.bf16.msra.mxu0 %v99
    %117 = vmatprep.subr.bf16.mxu0 0
    %118 = vmatpush1.bf16.msra.mxu0 %v100
    %119 = vmatprep.subr.bf16.mxu0 0
    %120 = vmatpush1.bf16.msra.mxu0 %v101
    %121 = vmatprep.subr.bf16.mxu0 0
    %122 = vmatpush1.bf16.msra.mxu0 %v102
    %123 = vmatprep.subr.bf16.mxu0 0
    %124 = vmatpush1.bf16.msra.mxu0 %v103
    %125 = vmatprep.subr.bf16.mxu0 0
    %126 = vmatpush1.bf16.msra.mxu0 %v104
    %127 = vmatprep.subr.bf16.mxu0 0
    %128 = vmatpush1.bf16.msra.mxu0 %v105
    %129 = vmatprep.subr.bf16.mxu0 0
    %130 = vmatpush1.bf16.msra.mxu0 %v106
    %131 = vmatprep.subr.bf16.mxu0 0
    %132 = vmatpush1.bf16.msra.mxu0 0
    %133 = vmatprep.subr.bf16.mxu0 0
    %134 = vmatpush1.bf16.msra.mxu0 0
    %135 = vmatprep.subr.bf16.mxu0 0
    %136 = vmatpush1.bf16.msra.mxu0 0
    %137 = vmatprep.subr.bf16.mxu0 0
    %138 = vmatpush1.bf16.msra.mxu0 0
    %139 = vmatprep.subr.bf16.mxu0 0
    %140 = vmatpush1.bf16.msra.mxu0 0
    %141 = vmatprep.subr.bf16.mxu0 0
    %142 = vmatpush1.bf16.msra.mxu0 0
    %143 = vmatprep.subr.bf16.mxu0 0
    %144 = vmatpush1.bf16.msra.mxu0 0
    %145 = vmatprep.subr.bf16.mxu0 0
    %146 = vmatpush1.bf16.msra.mxu0 0
    %147 = vmatprep.mubr.bf16.mxu0 0
    %148 = vmatmul.mubr.bf16.gmra.mrb[0].mxu0 %v43
    %v149 = vpop.f32.mrb[0].mxu0
    %v150 = vadd.f32 %v65, %v149
    %v151 = vpop.f32.mrb[0].mxu0
    %v152 = vpop.f32.mrb[0].mxu0
    %v153 = vpop.f32.mrb[0].mxu0
    %154 = vdwg.mxu0
    %v155 = vmax.f32 %v150, 0.0
    %v156 = vpack.c.bf16 %v155, %v155
    %s157 = scalar_lea.vmem [#allocation5], 64
    %v158 = vld [vmem:[%s157] sm:$0xf]
    %v159 = vld [vmem:[%s157 + $0x4] sm:$0xf]
    %v160 = vld [vmem:[%s157 + $0x8] sm:$0xf]
    %v161 = vld [vmem:[%s157 + $0xc] sm:$0xf]
    %v162 = vld [vmem:[%s157 + $0x10] sm:$0xf]
    %v163 = vld [vmem:[%s157 + $0x14] sm:$0xf]
    %v164 = vld [vmem:[%s157 + $0x18] sm:$0xf]
    %v165 = vld [vmem:[%s157 + $0x1c] sm:$0xf]
    %v166 = vld [vmem:[%s157 + $0x20] sm:$0xf]
    %v167 = vld [vmem:[%s157 + $0x24] sm:$0xf]
    %v168 = vld [vmem:[%s157 + $0x28] sm:$0xf]
    %v169 = vld [vmem:[%s157 + $0x2c] sm:$0xf]
    %v170 = vld [vmem:[%s157 + $0x30] sm:$0xf]
    %v171 = vld [vmem:[%s157 + $0x34] sm:$0xf]
    %v172 = vld [vmem:[%s157 + $0x38] sm:$0xf]
    %v173 = vld [vmem:[%s157 + $0x3c] sm:$0xf]
    %s174 = scalar_lea.vmem %s2, 1
    %v175 = vld [vmem:[%s174] sm:$0x1]
    %v177 = vlaneseq
    %v178 = vshrl.u32 %v177, 7
    %v179 = vsub.s32 0, %v178
    %v180 = vrot.slane %v175, %v179
    %v198 = vunpack.c.l.b16 %v158
    %v199 = vunpack.c.l.b16 %v159
    %v200 = vunpack.c.l.b16 %v160
    %v201 = vunpack.c.l.b16 %v161
    %v202 = vunpack.c.l.b16 %v162
    %v203 = vunpack.c.l.b16 %v163
    %v204 = vunpack.c.l.b16 %v164
    %v205 = vunpack.c.l.b16 %v165
    %v206 = vunpack.c.l.b16 %v166
    %v207 = vunpack.c.l.b16 %v167
    %v208 = vunpack.c.l.b16 %v168
    %v209 = vunpack.c.l.b16 %v169
    %v210 = vunpack.c.l.b16 %v170
    %v211 = vunpack.c.l.b16 %v171
    %v212 = vunpack.c.l.b16 %v172
    %v213 = vunpack.c.l.b16 %v173
    %v214 = vpack.c.b16 %v199, %v198
    %v215 = vpack.c.b16 %v201, %v200
    %v216 = vpack.c.b16 %v203, %v202
    %v217 = vpack.c.b16 %v205, %v204
    %v218 = vpack.c.b16 %v207, %v206
    %v219 = vpack.c.b16 %v209, %v208
    %v220 = vpack.c.b16 %v211, %v210
    %v221 = vpack.c.b16 %v213, %v212
    %230 = vmatprep.subr.bf16.mxu0 0
    %231 = vmatpush1.bf16.msra.mxu0 %v214
    %232 = vmatprep.subr.bf16.mxu0 0
    %233 = vmatpush1.bf16.msra.mxu0 %v215
    %234 = vmatprep.subr.bf16.mxu0 0
    %235 = vmatpush1.bf16.msra.mxu0 %v216
    %236 = vmatprep.subr.bf16.mxu0 0
    %237 = vmatpush1.bf16.msra.mxu0 %v217
    %238 = vmatprep.subr.bf16.mxu0 0
    %239 = vmatpush1.bf16.msra.mxu0 %v218
    %240 = vmatprep.subr.bf16.mxu0 0
    %241 = vmatpush1.bf16.msra.mxu0 %v219
    %242 = vmatprep.subr.bf16.mxu0 0
    %243 = vmatpush1.bf16.msra.mxu0 %v220
    %244 = vmatprep.subr.bf16.mxu0 0
    %245 = vmatpush1.bf16.msra.mxu0 %v221
    %246 = vmatprep.subr.bf16.mxu0 0
    %247 = vmatpush1.bf16.msra.mxu0 0
    %248 = vmatprep.subr.bf16.mxu0 0
    %249 = vmatpush1.bf16.msra.mxu0 0
    %250 = vmatprep.subr.bf16.mxu0 0
    %251 = vmatpush1.bf16.msra.mxu0 0
    %252 = vmatprep.subr.bf16.mxu0 0
    %253 = vmatpush1.bf16.msra.mxu0 0
    %254 = vmatprep.subr.bf16.mxu0 0
    %255 = vmatpush1.bf16.msra.mxu0 0
    %256 = vmatprep.subr.bf16.mxu0 0
    %257 = vmatpush1.bf16.msra.mxu0 0
    %258 = vmatprep.subr.bf16.mxu0 0
    %259 = vmatpush1.bf16.msra.mxu0 0
    %260 = vmatprep.subr.bf16.mxu0 0
    %261 = vmatpush1.bf16.msra.mxu0 0
    %262 = vmatprep.mubr.bf16.mxu0 0
    %263 = vmatmul.mubr.bf16.gmra.mrb[0].mxu0 %v156
    %v264 = vpop.f32.mrb[0].mxu0
    %v265 = vadd.f32 %v180, %v264
    %v266 = vpop.f32.mrb[0].mxu0
    %v267 = vpop.f32.mrb[0].mxu0
    %v268 = vpop.f32.mrb[0].mxu0
    %269 = vdwg.mxu0
    %v270 = vmax.f32 %v265, 0.0
    %v271 = vpack.c.bf16 %v270, %v270
    %s272 = scalar_lea.vmem [#allocation5], 128
    %v273 = vld [vmem:[%s272] sm:$0xf]
    %v274 = vld [vmem:[%s272 + $0x4] sm:$0xf]
    %v275 = vld [vmem:[%s272 + $0x8] sm:$0xf]
    %v276 = vld [vmem:[%s272 + $0xc] sm:$0xf]
    %v277 = vld [vmem:[%s272 + $0x10] sm:$0xf]
    %v278 = vld [vmem:[%s272 + $0x14] sm:$0xf]
    %v279 = vld [vmem:[%s272 + $0x18] sm:$0xf]
    %v280 = vld [vmem:[%s272 + $0x1c] sm:$0xf]
    %v281 = vld [vmem:[%s272 + $0x20] sm:$0xf]
    %v282 = vld [vmem:[%s272 + $0x24] sm:$0xf]
    %v283 = vld [vmem:[%s272 + $0x28] sm:$0xf]
    %v284 = vld [vmem:[%s272 + $0x2c] sm:$0xf]
    %v285 = vld [vmem:[%s272 + $0x30] sm:$0xf]
    %v286 = vld [vmem:[%s272 + $0x34] sm:$0xf]
    %v287 = vld [vmem:[%s272 + $0x38] sm:$0xf]
    %v288 = vld [vmem:[%s272 + $0x3c] sm:$0xf]
    %s289 = scalar_lea.vmem %s2, 2
    %v290 = vld [vmem:[%s289] sm:$0x1]
    %v292 = vlaneseq
    %v293 = vshrl.u32 %v292, 7
    %v294 = vsub.s32 0, %v293
    %v295 = vrot.slane %v290, %v294
    %v313 = vunpack.c.l.b16 %v273
    %v314 = vunpack.c.l.b16 %v274
    %v315 = vunpack.c.l.b16 %v275
    %v316 = vunpack.c.l.b16 %v276
    %v317 = vunpack.c.l.b16 %v277
    %v318 = vunpack.c.l.b16 %v278
    %v319 = vunpack.c.l.b16 %v279
    %v320 = vunpack.c.l.b16 %v280
    %v321 = vunpack.c.l.b16 %v281
    %v322 = vunpack.c.l.b16 %v282
    %v323 = vunpack.c.l.b16 %v283
    %v324 = vunpack.c.l.b16 %v284
    %v325 = vunpack.c.l.b16 %v285
    %v326 = vunpack.c.l.b16 %v286
    %v327 = vunpack.c.l.b16 %v287
    %v328 = vunpack.c.l.b16 %v288
    %v329 = vpack.c.b16 %v314, %v313
    %v330 = vpack.c.b16 %v316, %v315
    %v331 = vpack.c.b16 %v318, %v317
    %v332 = vpack.c.b16 %v320, %v319
    %v333 = vpack.c.b16 %v322, %v321
    %v334 = vpack.c.b16 %v324, %v323
    %v335 = vpack.c.b16 %v326, %v325
    %v336 = vpack.c.b16 %v328, %v327
    %345 = vmatprep.subr.bf16.mxu0 0
    %346 = vmatpush1.bf16.msra.mxu0 %v329
    %347 = vmatprep.subr.bf16.mxu0 0
    %348 = vmatpush1.bf16.msra.mxu0 %v330
    %349 = vmatprep.subr.bf16.mxu0 0
    %350 = vmatpush1.bf16.msra.mxu0 %v331
    %351 = vmatprep.subr.bf16.mxu0 0
    %352 = vmatpush1.bf16.msra.mxu0 %v332
    %353 = vmatprep.subr.bf16.mxu0 0
    %354 = vmatpush1.bf16.msra.mxu0 %v333
    %355 = vmatprep.subr.bf16.mxu0 0
    %356 = vmatpush1.bf16.msra.mxu0 %v334
    %357 = vmatprep.subr.bf16.mxu0 0
    %358 = vmatpush1.bf16.msra.mxu0 %v335
    %359 = vmatprep.subr.bf16.mxu0 0
    %360 = vmatpush1.bf16.msra.mxu0 %v336
    %361 = vmatprep.subr.bf16.mxu0 0
    %362 = vmatpush1.bf16.msra.mxu0 0
    %363 = vmatprep.subr.bf16.mxu0 0
    %364 = vmatpush1.bf16.msra.mxu0 0
    %365 = vmatprep.subr.bf16.mxu0 0
    %366 = vmatpush1.bf16.msra.mxu0 0
    %367 = vmatprep.subr.bf16.mxu0 0
    %368 = vmatpush1.bf16.msra.mxu0 0
    %369 = vmatprep.subr.bf16.mxu0 0
    %370 = vmatpush1.bf16.msra.mxu0 0
    %371 = vmatprep.subr.bf16.mxu0 0
    %372 = vmatpush1.bf16.msra.mxu0 0
    %373 = vmatprep.subr.bf16.mxu0 0
    %374 = vmatpush1.bf16.msra.mxu0 0
    %375 = vmatprep.subr.bf16.mxu0 0
    %376 = vmatpush1.bf16.msra.mxu0 0
    %377 = vmatprep.mubr.bf16.mxu0 0
    %378 = vmatmul.mubr.bf16.gmra.mrb[0].mxu0 %v271
    %v379 = vpop.f32.mrb[0].mxu0
    %v380 = vadd.f32 %v295, %v379
    %v381 = vpop.f32.mrb[0].mxu0
    %v382 = vpop.f32.mrb[0].mxu0
    %v383 = vpop.f32.mrb[0].mxu0
    %384 = vdwg.mxu0
    %385 = vst [vmem:[#allocation7] sm:$0xff] %v380
    // Predicated region
    $region22: #{tpu_custom_call.1} parent=1 // pred_check
      _
    $region23: #{tpu_custom_call.1} parent=1 // pred_check_branch
      %387 = sbr.rel (0) target = $region25
    $region24: #{tpu_custom_call.1} parent=1 // pred_region
      %s389 = ssub.s32 128, 128
      %390 = vsyncadd [#allocation4], %s389
      %s392 = sshll.u32 [#allocation7], 4
      %s393 = int_to_ptr.vmem [resolvable:$true] %s392
      %395 = dma.vmem_to_hbm [thread:$0]  %s393, 128, %s3, [#allocation4]
    $region25: #{tpu_custom_call.1} parent=1 // pred_fallthru
      _
    // Predicated region
    $region26: #{tpu_custom_call.1} parent=1 // pred_check
      _
    $region27: #{tpu_custom_call.1} parent=1 // pred_check_branch
      %397 = sbr.rel (0) target = $region29
    $region28: #{tpu_custom_call.1} parent=1 // pred_region
      %398 = dma.done [#allocation4], 128
    $region29: #{tpu_custom_call.1} parent=1 // pred_fallthru
      _
    %399 = vsyncpa [#allocation3], 1
    %400 = vsyncpa [#allocation6], 1
    %401 = vsyncpa [#allocation4], 1

</llo_original>
